<compile_context>
chip_gen: v5e
topology: v5e:2x2
jax: 0.10.0
libtpu: 0.0.40
codegen_flags: <defaults>
</compile_context>

<pallas_src>
import functools

import jax
import jax.numpy as jnp
from jax.experimental import pallas as pl
from jax.experimental.pallas import tpu as pltpu

EMB_DIM = 32
HIDDEN_DIM = 64
NUM_HID = 8                     # num_net hidden width (Linear(2, 8))
NUM_OUT = EMB_DIM // 4          # num_net output width = 8
CAT_DIM = 3 * EMB_DIM           # 96  (ue | ge | uf)
TOTAL_DIM = CAT_DIM + NUM_OUT   # 104 (ue | ge | uf | ne)
FUSE_K = 128                    # fuse layer-1 contraction, padded to one lane tile


def _round_up(x, m):
    return (x + m - 1) // m * m


def content_kernel(x_ref, num_ref, nw1_ref, nb1_ref, nw2_ref, nb2_ref,
                   fw1_ref, fb1_ref, fw2_ref, fb2_ref, out_ref):
    f32 = jnp.float32
    x96 = x_ref[...]                     # (96, TB)  [ue | ge | uf] features, batch on lanes
    num = num_ref[...]                   # (2,  TB)  [movie_avg ; user_avg]

    # ---- num_net: Linear(2,8) -> ReLU -> Linear(8,8) on the VPU (rank-1 updates;
    #      K=2 / K=8 matmuls would waste MXU push/pop for almost no work).
    nw1 = nw1_ref[...]                   # (8, 2) == nw1.T
    h1 = nw1[:, 0:1] * num[0:1, :] + nw1[:, 1:2] * num[1:2, :] + nb1_ref[...]
    h1 = jnp.maximum(h1, 0.0)            # (8, TB)
    nw2 = nw2_ref[...]                   # (8, 8) == nw2.T
    ne = nb2_ref[...]                    # (8, 1), broadcasts up to (8, TB)
    for k in range(NUM_HID):             # static unroll: 8 vmul/vadd pairs
        ne = ne + nw2[:, k:k + 1] * h1[k:k + 1, :]

    # ---- fuse layer 1: single K=128 MXU matmul on the padded feature-major activation.
    #      Sublane concat offsets 0 / 96 / 104 are all multiples of 8 (clean, no masking).
    tb = x96.shape[1]
    zpad = jnp.zeros((FUSE_K - TOTAL_DIM, tb), f32)
    x128 = jnp.concatenate([x96, ne, zpad], axis=0)                         # (128, TB)
    h = jnp.dot(fw1_ref[...], x128, preferred_element_type=f32) + fb1_ref[...]  # (64, TB)
    h = jnp.maximum(h, 0.0)

    # ---- fuse layer 2: Linear(64, 1); result stays lane-dense as (1, TB).
    out_ref[...] = jnp.dot(fw2_ref[...], h, preferred_element_type=f32) + fb2_ref[...]


@functools.partial(jax.jit, static_argnames=("block_b",))
def content_model_forward(params, user, genres, user_fav, movie_avg, user_avg,
                          block_b=1024):
    f32 = jnp.float32

    # --- XLA glue: embedding gathers + fixed-slot means (never materialize (B,G,E) for
    #     the kernel; padding_idx=0 rows of genre_emb are zero so means match the module).
    ue = params["user_emb"][user].astype(f32)                      # (B, 32)
    ge = params["genre_emb"][genres].astype(f32).mean(axis=1)      # (B, 32)
    uf = params["genre_emb"][user_fav].astype(f32).mean(axis=1)    # (B, 32)

    B = user.shape[0]
    tb = min(block_b, _round_up(B, 128))          # lane-dense batch tile (multiple of 128)
    b_pad = _round_up(B, tb)

    # --- Feature-major (transposed) activations: batch lies along the lane axis.
    x_t = jnp.concatenate([ue, ge, uf], axis=1).T                  # (96, B)
    num_t = jnp.stack([movie_avg, user_avg], axis=0).astype(f32)   # (2,  B)
    if b_pad != B:
        x_t = jnp.pad(x_t, ((0, 0), (0, b_pad - B)))
        num_t = jnp.pad(num_t, ((0, 0), (0, b_pad - B)))

    # --- Kernel-layout weights (transposed; fuse W1 zero-padded 104 -> 128 on K axis).
    nw1_t = params["nw1"].T                                        # (8, 2)
    nb1_t = params["nb1"].T                                        # (8, 1)
    nw2_t = params["nw2"].T                                        # (8, 8)
    nb2_t = params["nb2"].T                                        # (8, 1)
    fw1_t = jnp.pad(params["fw1"], ((0, FUSE_K - TOTAL_DIM), (0, 0))).T   # (64, 128)
    fb1_t = params["fb1"].T                                        # (64, 1)
    fw2_t = params["fw2"].T                                        # (1, 64)
    fb2_t = params["fb2"]                                          # (1, 1)

    def batch_spec(shape):
        return pl.BlockSpec(shape, lambda i: (0, i))

    def const_spec(shape):                 # same block every step -> no re-DMA of weights
        return pl.BlockSpec(shape, lambda i: (0, 0))

    out = pl.pallas_call(
        content_kernel,
        out_shape=jax.ShapeDtypeStruct((1, b_pad), f32),
        grid_spec=pltpu.PrefetchScalarGridSpec(
            num_scalar_prefetch=0,
            grid=(b_pad // tb,),
            in_specs=[
                batch_spec((CAT_DIM, tb)),          # x_t
                batch_spec((2, tb)),                # num_t
                const_spec((NUM_HID, 2)),           # nw1_t
                const_spec((NUM_HID, 1)),           # nb1_t
                const_spec((NUM_OUT, NUM_HID)),     # nw2_t
                const_spec((NUM_OUT, 1)),           # nb2_t
                const_spec((HIDDEN_DIM, FUSE_K)),   # fw1_t (padded)
                const_spec((HIDDEN_DIM, 1)),        # fb1_t
                const_spec((1, HIDDEN_DIM)),        # fw2_t
                const_spec((1, 1)),                 # fb2_t
            ],
            out_specs=pl.BlockSpec((1, tb), lambda i: (0, i)),
        ),
        compiler_params=pltpu.CompilerParams(
            dimension_semantics=("parallel",),      # v7x: shard batch tiles across both TCs
            vmem_limit_bytes=32 * 1024 * 1024,
        ),
    )(x_t, num_t, nw1_t, nb1_t, nw2_t, nb2_t, fw1_t, fb1_t, fw2_t, fb2_t)

    return out[0, :B]                               # drop batch padding, squeeze(1)


def reference_forward(params, user, genres, user_fav, movie_avg, user_avg):
    ue = params["user_emb"][user]
    ge = params["genre_emb"][genres].mean(axis=1)
    uf = params["genre_emb"][user_fav].mean(axis=1)
    num = jnp.stack([movie_avg, user_avg], axis=1)
    # num_net written elementwise (mathematically identical to the Linear layers) so the
    # reference is exact f32, matching the kernel's VPU path regardless of TPU matmul defaults.
    h1 = jnp.maximum(num[:, 0:1] * params["nw1"][0:1, :]
                     + num[:, 1:2] * params["nw1"][1:2, :] + params["nb1"], 0.0)
    ne = params["nb2"] + sum(h1[:, k:k + 1] * params["nw2"][k:k + 1, :]
                             for k in range(NUM_HID))
    x = jnp.concatenate([ue, ge, uf, ne], axis=1)
    h = jnp.maximum(x @ params["fw1"] + params["fb1"], 0.0)
    return (h @ params["fw2"] + params["fb2"])[:, 0]


def init_params(key, num_users, num_genres):
    ks = jax.random.split(key, 10)

    def u(k, shape, scale):
        return jax.random.uniform(k, shape, jnp.float32, -scale, scale)

    genre_emb = jax.random.normal(ks[1], (num_genres, EMB_DIM), jnp.float32)
    genre_emb = genre_emb.at[0].set(0.0)          # padding_idx=0
    return {
        "user_emb": jax.random.normal(ks[0], (num_users, EMB_DIM), jnp.float32),
        "genre_emb": genre_emb,
        # Linear weights stored transposed (in_dim, out_dim); biases as (1, out_dim).
        "nw1": u(ks[2], (2, NUM_HID), 1.0 / 2 ** 0.5),
        "nb1": u(ks[3], (1, NUM_HID), 1.0 / 2 ** 0.5),
        "nw2": u(ks[4], (NUM_HID, NUM_OUT), 1.0 / NUM_HID ** 0.5),
        "nb2": u(ks[5], (1, NUM_OUT), 1.0 / NUM_HID ** 0.5),
        "fw1": u(ks[6], (TOTAL_DIM, HIDDEN_DIM), 1.0 / TOTAL_DIM ** 0.5),
        "fb1": u(ks[7], (1, HIDDEN_DIM), 1.0 / TOTAL_DIM ** 0.5),
        "fw2": u(ks[8], (HIDDEN_DIM, 1), 1.0 / HIDDEN_DIM ** 0.5),
        "fb2": u(ks[9], (1, 1), 1.0 / HIDDEN_DIM ** 0.5),
    }


if __name__ == "__main__":
    key = jax.random.PRNGKey(0)
    k_params, k_user, k_gen, k_fav, k_ma, k_ua = jax.random.split(key, 6)

    num_users, num_genres = 10, 12
    B, G, F = 8, 6, 4   # batch, genres-per-movie, user-favorite slots

    params = init_params(k_params, num_users, num_genres)

    user = jax.random.randint(k_user, (B,), 0, num_users, dtype=jnp.int32)
    genres = jax.random.randint(k_gen, (B, G), 0, num_genres, dtype=jnp.int32)
    user_fav = jax.random.randint(k_fav, (B, F), 0, num_genres, dtype=jnp.int32)
    movie_avg = jax.random.uniform(k_ma, (B,), jnp.float32, 0.0, 5.0)
    user_avg = jax.random.uniform(k_ua, (B,), jnp.float32, 0.0, 5.0)

    out = jax.block_until_ready(
        content_model_forward(params, user, genres, user_fav, movie_avg, user_avg))
    ref = reference_forward(params, user, genres, user_fav, movie_avg, user_avg)
    assert out.shape == (B,)
    assert jnp.allclose(out, ref, atol=1e-4, rtol=1e-4), (out, ref)

    # Larger batch with several grid steps (exercises pipelining, batch padding and the
    # constant-index weight blocks).
    B2 = 300
    k2 = jax.random.split(jax.random.PRNGKey(1), 5)
    user2 = jax.random.randint(k2[0], (B2,), 0, num_users, dtype=jnp.int32)
    genres2 = jax.random.randint(k2[1], (B2, G), 0, num_genres, dtype=jnp.int32)
    fav2 = jax.random.randint(k2[2], (B2, F), 0, num_genres, dtype=jnp.int32)
    ma2 = jax.random.uniform(k2[3], (B2,), jnp.float32, 0.0, 5.0)
    ua2 = jax.random.uniform(k2[4], (B2,), jnp.float32, 0.0, 5.0)
    out2 = jax.block_until_ready(
        content_model_forward(params, user2, genres2, fav2, ma2, ua2, block_b=128))
    ref2 = reference_forward(params, user2, genres2, fav2, ma2, ua2)
    assert out2.shape == (B2,)
    assert jnp.allclose(out2, ref2, atol=1e-4, rtol=1e-4), (out2, ref2)

    print("KERNEL_OK")
</pallas_src>

<mosaic_0001>
module attributes {stable_mosaic.version = 11 : i64} {
  func.func @content_kernel(%arg0: i32, %arg1: memref<96x128xf32, #tpu.memory_space<vmem>>, %arg2: memref<2x128xf32, #tpu.memory_space<vmem>>, %arg3: memref<8x2xf32, #tpu.memory_space<vmem>>, %arg4: memref<8x1xf32, #tpu.memory_space<vmem>>, %arg5: memref<8x8xf32, #tpu.memory_space<vmem>>, %arg6: memref<8x1xf32, #tpu.memory_space<vmem>>, %arg7: memref<64x128xf32, #tpu.memory_space<vmem>>, %arg8: memref<64x1xf32, #tpu.memory_space<vmem>>, %arg9: memref<1x64xf32, #tpu.memory_space<vmem>>, %arg10: memref<1x1xf32, #tpu.memory_space<vmem>>, %arg11: memref<1x128xf32, #tpu.memory_space<vmem>>) attributes {dimension_semantics = [#tpu.dimension_semantics<parallel>], iteration_bounds = array<i64: 1>, scalar_prefetch = 0 : i64, scratch_operands = 0 : i64, tpu.core_type = #tpu.core_type<tc>, window_params = [{transform_indices = @transform_0, window_bounds = array<i64: 96, 128>}, {transform_indices = @transform_1, window_bounds = array<i64: 2, 128>}, {pipeline_mode = #tpu.pipeline_mode<synchronous>, transform_indices = @transform_2, window_bounds = array<i64: 8, 2>}, {pipeline_mode = #tpu.pipeline_mode<synchronous>, transform_indices = @transform_3, window_bounds = array<i64: 8, 1>}, {pipeline_mode = #tpu.pipeline_mode<synchronous>, transform_indices = @transform_4, window_bounds = array<i64: 8, 8>}, {pipeline_mode = #tpu.pipeline_mode<synchronous>, transform_indices = @transform_5, window_bounds = array<i64: 8, 1>}, {pipeline_mode = #tpu.pipeline_mode<synchronous>, transform_indices = @transform_6, window_bounds = array<i64: 64, 128>}, {pipeline_mode = #tpu.pipeline_mode<synchronous>, transform_indices = @transform_7, window_bounds = array<i64: 64, 1>}, {pipeline_mode = #tpu.pipeline_mode<synchronous>, transform_indices = @transform_8, window_bounds = array<i64: 1, 64>}, {pipeline_mode = #tpu.pipeline_mode<synchronous>, transform_indices = @transform_9, window_bounds = array<i64: 1, 1>}, {transform_indices = @transform_10, window_bounds = array<i64: 1, 128>}]} {
    %c0 = arith.constant 0 : index
    %c0_0 = arith.constant 0 : index
    %0 = vector.load %arg1[%c0, %c0_0] : memref<96x128xf32, #tpu.memory_space<vmem>>, vector<96x128xf32>
    %c0_1 = arith.constant 0 : index
    %c0_2 = arith.constant 0 : index
    %1 = vector.load %arg2[%c0_1, %c0_2] : memref<2x128xf32, #tpu.memory_space<vmem>>, vector<2x128xf32>
    %c0_3 = arith.constant 0 : index
    %c0_4 = arith.constant 0 : index
    %2 = vector.load %arg3[%c0_3, %c0_4] : memref<8x2xf32, #tpu.memory_space<vmem>>, vector<8x2xf32>
    %3 = vector.extract_strided_slice %2 {offsets = [0, 0], sizes = [8, 1], strides = [1, 1]} : vector<8x2xf32> to vector<8x1xf32>
    %4 = vector.extract_strided_slice %1 {offsets = [0, 0], sizes = [1, 128], strides = [1, 1]} : vector<2x128xf32> to vector<1x128xf32>
    %5 = vector.broadcast %3 : vector<8x1xf32> to vector<8x128xf32>
    %6 = vector.broadcast %4 : vector<1x128xf32> to vector<8x128xf32>
    %7 = arith.mulf %5, %6 : vector<8x128xf32>
    %8 = vector.extract_strided_slice %2 {offsets = [0, 1], sizes = [8, 1], strides = [1, 1]} : vector<8x2xf32> to vector<8x1xf32>
    %9 = vector.extract_strided_slice %1 {offsets = [1, 0], sizes = [1, 128], strides = [1, 1]} : vector<2x128xf32> to vector<1x128xf32>
    %10 = vector.broadcast %8 : vector<8x1xf32> to vector<8x128xf32>
    %11 = vector.broadcast %9 : vector<1x128xf32> to vector<8x128xf32>
    %12 = arith.mulf %10, %11 : vector<8x128xf32>
    %13 = arith.addf %7, %12 : vector<8x128xf32>
    %c0_5 = arith.constant 0 : index
    %c0_6 = arith.constant 0 : index
    %14 = vector.load %arg4[%c0_5, %c0_6] : memref<8x1xf32, #tpu.memory_space<vmem>>, vector<8x1xf32>
    %15 = vector.broadcast %14 : vector<8x1xf32> to vector<8x128xf32>
    %16 = arith.addf %13, %15 : vector<8x128xf32>
    %cst = arith.constant 0.000000e+00 : f32
    %17 = vector.broadcast %cst : f32 to vector<8x128xf32>
    %18 = arith.maximumf %16, %17 : vector<8x128xf32>
    %c0_7 = arith.constant 0 : index
    %c0_8 = arith.constant 0 : index
    %19 = vector.load %arg5[%c0_7, %c0_8] : memref<8x8xf32, #tpu.memory_space<vmem>>, vector<8x8xf32>
    %c0_9 = arith.constant 0 : index
    %c0_10 = arith.constant 0 : index
    %20 = vector.load %arg6[%c0_9, %c0_10] : memref<8x1xf32, #tpu.memory_space<vmem>>, vector<8x1xf32>
    %21 = vector.extract_strided_slice %19 {offsets = [0, 0], sizes = [8, 1], strides = [1, 1]} : vector<8x8xf32> to vector<8x1xf32>
    %22 = vector.extract_strided_slice %18 {offsets = [0, 0], sizes = [1, 128], strides = [1, 1]} : vector<8x128xf32> to vector<1x128xf32>
    %23 = vector.broadcast %21 : vector<8x1xf32> to vector<8x128xf32>
    %24 = vector.broadcast %22 : vector<1x128xf32> to vector<8x128xf32>
    %25 = arith.mulf %23, %24 : vector<8x128xf32>
    %26 = vector.broadcast %20 : vector<8x1xf32> to vector<8x128xf32>
    %27 = arith.addf %26, %25 : vector<8x128xf32>
    %28 = vector.extract_strided_slice %19 {offsets = [0, 1], sizes = [8, 1], strides = [1, 1]} : vector<8x8xf32> to vector<8x1xf32>
    %29 = vector.extract_strided_slice %18 {offsets = [1, 0], sizes = [1, 128], strides = [1, 1]} : vector<8x128xf32> to vector<1x128xf32>
    %30 = vector.broadcast %28 : vector<8x1xf32> to vector<8x128xf32>
    %31 = vector.broadcast %29 : vector<1x128xf32> to vector<8x128xf32>
    %32 = arith.mulf %30, %31 : vector<8x128xf32>
    %33 = arith.addf %27, %32 : vector<8x128xf32>
    %34 = vector.extract_strided_slice %19 {offsets = [0, 2], sizes = [8, 1], strides = [1, 1]} : vector<8x8xf32> to vector<8x1xf32>
    %35 = vector.extract_strided_slice %18 {offsets = [2, 0], sizes = [1, 128], strides = [1, 1]} : vector<8x128xf32> to vector<1x128xf32>
    %36 = vector.broadcast %34 : vector<8x1xf32> to vector<8x128xf32>
    %37 = vector.broadcast %35 : vector<1x128xf32> to vector<8x128xf32>
    %38 = arith.mulf %36, %37 : vector<8x128xf32>
    %39 = arith.addf %33, %38 : vector<8x128xf32>
    %40 = vector.extract_strided_slice %19 {offsets = [0, 3], sizes = [8, 1], strides = [1, 1]} : vector<8x8xf32> to vector<8x1xf32>
    %41 = vector.extract_strided_slice %18 {offsets = [3, 0], sizes = [1, 128], strides = [1, 1]} : vector<8x128xf32> to vector<1x128xf32>
    %42 = vector.broadcast %40 : vector<8x1xf32> to vector<8x128xf32>
    %43 = vector.broadcast %41 : vector<1x128xf32> to vector<8x128xf32>
    %44 = arith.mulf %42, %43 : vector<8x128xf32>
    %45 = arith.addf %39, %44 : vector<8x128xf32>
    %46 = vector.extract_strided_slice %19 {offsets = [0, 4], sizes = [8, 1], strides = [1, 1]} : vector<8x8xf32> to vector<8x1xf32>
    %47 = vector.extract_strided_slice %18 {offsets = [4, 0], sizes = [1, 128], strides = [1, 1]} : vector<8x128xf32> to vector<1x128xf32>
    %48 = vector.broadcast %46 : vector<8x1xf32> to vector<8x128xf32>
    %49 = vector.broadcast %47 : vector<1x128xf32> to vector<8x128xf32>
    %50 = arith.mulf %48, %49 : vector<8x128xf32>
    %51 = arith.addf %45, %50 : vector<8x128xf32>
    %52 = vector.extract_strided_slice %19 {offsets = [0, 5], sizes = [8, 1], strides = [1, 1]} : vector<8x8xf32> to vector<8x1xf32>
    %53 = vector.extract_strided_slice %18 {offsets = [5, 0], sizes = [1, 128], strides = [1, 1]} : vector<8x128xf32> to vector<1x128xf32>
    %54 = vector.broadcast %52 : vector<8x1xf32> to vector<8x128xf32>
    %55 = vector.broadcast %53 : vector<1x128xf32> to vector<8x128xf32>
    %56 = arith.mulf %54, %55 : vector<8x128xf32>
    %57 = arith.addf %51, %56 : vector<8x128xf32>
    %58 = vector.extract_strided_slice %19 {offsets = [0, 6], sizes = [8, 1], strides = [1, 1]} : vector<8x8xf32> to vector<8x1xf32>
    %59 = vector.extract_strided_slice %18 {offsets = [6, 0], sizes = [1, 128], strides = [1, 1]} : vector<8x128xf32> to vector<1x128xf32>
    %60 = vector.broadcast %58 : vector<8x1xf32> to vector<8x128xf32>
    %61 = vector.broadcast %59 : vector<1x128xf32> to vector<8x128xf32>
    %62 = arith.mulf %60, %61 : vector<8x128xf32>
    %63 = arith.addf %57, %62 : vector<8x128xf32>
    %64 = vector.extract_strided_slice %19 {offsets = [0, 7], sizes = [8, 1], strides = [1, 1]} : vector<8x8xf32> to vector<8x1xf32>
    %65 = vector.extract_strided_slice %18 {offsets = [7, 0], sizes = [1, 128], strides = [1, 1]} : vector<8x128xf32> to vector<1x128xf32>
    %66 = vector.broadcast %64 : vector<8x1xf32> to vector<8x128xf32>
    %67 = vector.broadcast %65 : vector<1x128xf32> to vector<8x128xf32>
    %68 = arith.mulf %66, %67 : vector<8x128xf32>
    %69 = arith.addf %63, %68 : vector<8x128xf32>
    %cst_11 = arith.constant 0.000000e+00 : f32
    %70 = vector.broadcast %cst_11 : f32 to vector<24x128xf32>
    %71 = tpu.concatenate %0, %69, %70 in 0 : vector<96x128xf32>, vector<8x128xf32>, vector<24x128xf32> -> vector<128x128xf32>
    %c0_12 = arith.constant 0 : index
    %c0_13 = arith.constant 0 : index
    %72 = vector.load %arg7[%c0_12, %c0_13] : memref<64x128xf32, #tpu.memory_space<vmem>>, vector<64x128xf32>
    %cst_14 = arith.constant dense<0.000000e+00> : vector<64x128xf32>
    %73 = tpu.matmul %72, %71, %cst_14 {dimension_numbers = #tpu.dot_dimension_numbers<[1], [0], [0], [1], [0, 0, 1, 1], [], []>} : vector<64x128xf32>, vector<128x128xf32>, vector<64x128xf32> -> vector<64x128xf32>
    %c0_15 = arith.constant 0 : index
    %c0_16 = arith.constant 0 : index
    %74 = vector.load %arg8[%c0_15, %c0_16] : memref<64x1xf32, #tpu.memory_space<vmem>>, vector<64x1xf32>
    %75 = vector.broadcast %74 : vector<64x1xf32> to vector<64x128xf32>
    %76 = arith.addf %73, %75 : vector<64x128xf32>
    %cst_17 = arith.constant 0.000000e+00 : f32
    %77 = vector.broadcast %cst_17 : f32 to vector<64x128xf32>
    %78 = arith.maximumf %76, %77 : vector<64x128xf32>
    %c0_18 = arith.constant 0 : index
    %c0_19 = arith.constant 0 : index
    %79 = vector.load %arg9[%c0_18, %c0_19] : memref<1x64xf32, #tpu.memory_space<vmem>>, vector<1x64xf32>
    %cst_20 = arith.constant dense<0.000000e+00> : vector<1x128xf32>
    %80 = tpu.matmul %79, %78, %cst_20 {dimension_numbers = #tpu.dot_dimension_numbers<[1], [0], [0], [1], [0, 0, 1, 1], [], []>} : vector<1x64xf32>, vector<64x128xf32>, vector<1x128xf32> -> vector<1x128xf32>
    %c0_21 = arith.constant 0 : index
    %c0_22 = arith.constant 0 : index
    %81 = vector.load %arg10[%c0_21, %c0_22] : memref<1x1xf32, #tpu.memory_space<vmem>>, vector<1x1xf32>
    %82 = vector.broadcast %81 : vector<1x1xf32> to vector<1x128xf32>
    %83 = arith.addf %80, %82 : vector<1x128xf32>
    %c0_23 = arith.constant 0 : index
    %c0_24 = arith.constant 0 : index
    %84 = vector.load %arg11[%c0_23, %c0_24] : memref<1x128xf32, #tpu.memory_space<vmem>>, vector<1x128xf32>
    tpu.vector_store %arg11[%c0_23, %c0_24], %83 {strides = array<i32>} : memref<1x128xf32, #tpu.memory_space<vmem>>, vector<1x128xf32>,
    return
  }
  func.func @transform_0(%arg0: i32) -> (i32, i32) {
    %c0_i32 = arith.constant 0 : i32
    %c0_i32_0 = arith.constant 0 : i32
    return %c0_i32, %arg0 : i32, i32
  }
  func.func @transform_1(%arg0: i32) -> (i32, i32) {
    %c0_i32 = arith.constant 0 : i32
    %c0_i32_0 = arith.constant 0 : i32
    return %c0_i32, %arg0 : i32, i32
  }
  func.func @transform_2(%arg0: i32) -> (i32, i32) {
    %c0_i32 = arith.constant 0 : i32
    %c0_i32_0 = arith.constant 0 : i32
    %c0_i32_1 = arith.constant 0 : i32
    return %c0_i32, %c0_i32_0 : i32, i32
  }
  func.func @transform_3(%arg0: i32) -> (i32, i32) {
    %c0_i32 = arith.constant 0 : i32
    %c0_i32_0 = arith.constant 0 : i32
    %c0_i32_1 = arith.constant 0 : i32
    return %c0_i32, %c0_i32_0 : i32, i32
  }
  func.func @transform_4(%arg0: i32) -> (i32, i32) {
    %c0_i32 = arith.constant 0 : i32
    %c0_i32_0 = arith.constant 0 : i32
    %c0_i32_1 = arith.constant 0 : i32
    return %c0_i32, %c0_i32_0 : i32, i32
  }
  func.func @transform_5(%arg0: i32) -> (i32, i32) {
    %c0_i32 = arith.constant 0 : i32
    %c0_i32_0 = arith.constant 0 : i32
    %c0_i32_1 = arith.constant 0 : i32
    return %c0_i32, %c0_i32_0 : i32, i32
  }
  func.func @transform_6(%arg0: i32) -> (i32, i32) {
    %c0_i32 = arith.constant 0 : i32
    %c0_i32_0 = arith.constant 0 : i32
    %c0_i32_1 = arith.constant 0 : i32
    return %c0_i32, %c0_i32_0 : i32, i32
  }
  func.func @transform_7(%arg0: i32) -> (i32, i32) {
    %c0_i32 = arith.constant 0 : i32
    %c0_i32_0 = arith.constant 0 : i32
    %c0_i32_1 = arith.constant 0 : i32
    return %c0_i32, %c0_i32_0 : i32, i32
  }
  func.func @transform_8(%arg0: i32) -> (i32, i32) {
    %c0_i32 = arith.constant 0 : i32
    %c0_i32_0 = arith.constant 0 : i32
    %c0_i32_1 = arith.constant 0 : i32
    return %c0_i32, %c0_i32_0 : i32, i32
  }
  func.func @transform_9(%arg0: i32) -> (i32, i32) {
    %c0_i32 = arith.constant 0 : i32
    %c0_i32_0 = arith.constant 0 : i32
    %c0_i32_1 = arith.constant 0 : i32
    return %c0_i32, %c0_i32_0 : i32, i32
  }
  func.func @transform_10(%arg0: i32) -> (i32, i32) {
    %c0_i32 = arith.constant 0 : i32
    %c0_i32_0 = arith.constant 0 : i32
    return %c0_i32, %arg0 : i32, i32
  }
}

</mosaic_0001>

<llo_original>
// kernel: content_model_forward.1
$region0: #{content_model_forward.1}
  #allocation0 [shape = 'u32[]', space=smem, size = 0x4, offset = 0x4, fixed_abs, tag = 'smem constant byte address 0x4 - core index']
  #allocation1 [shape = 'u32[72,128]{1,0:T(1,128)}', space=vmem, size = 0x9000, scoped, tag = 'internal scratch']
  #allocation2 [shape = 'f32[1,1]{1,0:T(1,128)S(1)}', space=vmem, size = 0x200, scoped, tag = 'scoped memory for content_model_forward.1']
  %s0 = inlined_call_operand.vmem [shape: f32[96,128], index: 0, kind: input, shape index: {}]
  %s1 = inlined_call_operand.vmem [shape: f32[2,128], index: 1, kind: input, shape index: {}]
  %s2 = inlined_call_operand.vmem [shape: f32[8,2], index: 2, kind: input, shape index: {}]
  %s3 = inlined_call_operand.vmem [shape: f32[8,1], index: 3, kind: input, shape index: {}]
  %s4 = inlined_call_operand.vmem [shape: f32[8,8], index: 4, kind: input, shape index: {}]
  %s5 = inlined_call_operand.vmem [shape: f32[8,1], index: 5, kind: input, shape index: {}]
  %s6 = inlined_call_operand.vmem [shape: f32[64,128], index: 6, kind: input, shape index: {}]
  %s7 = inlined_call_operand.vmem [shape: f32[64,1], index: 7, kind: input, shape index: {}]
  %s8 = inlined_call_operand.vmem [shape: f32[1,64], index: 8, kind: input, shape index: {}]
  %s9 = inlined_call_operand.<no memory space> [shape: f32[1,1], index: 9, kind: input, shape index: {}]
  %s10 = inlined_call_operand.vmem [shape: f32[1,128], index: 10, kind: output, shape index: {}]
  %s11 = sld [smem:[#allocation0]]
  $region50: #{content_model_forward.1} parent=0
    _
  %s13 = ssub.s32 1, %s11
  %s14 = scalar_select 0, %s13, %s11
  %v15 = vstv %s9
  %16 = vst [vmem:[#allocation2] sm:$0x1] %v15
  // Predicated region
  $region2: #{content_model_forward.1} parent=0 // pred_check
    _
  $region3: #{content_model_forward.1} parent=0 // pred_check_branch
    %18 = sbr.rel (0) target = $region5
  $region4: #{content_model_forward.1} parent=0 // pred_region
    _
  $region5: #{content_model_forward.1} parent=0 // pred_fallthru
    _
  // Predicated region
  $region6: #{content_model_forward.1} parent=0 // pred_check
    _
  $region7: #{content_model_forward.1} parent=0 // pred_check_branch
    %20 = sbr.rel (0) target = $region9
  $region8: #{content_model_forward.1} parent=0 // pred_region
    _
  $region9: #{content_model_forward.1} parent=0 // pred_fallthru
    _
  // Predicated region
  $region10: #{content_model_forward.1} parent=0 // pred_check
    _
  $region11: #{content_model_forward.1} parent=0 // pred_check_branch
    %22 = sbr.rel (0) target = $region13
  $region12: #{content_model_forward.1} parent=0 // pred_region
    _
  $region13: #{content_model_forward.1} parent=0 // pred_fallthru
    _
  // Predicated region
  $region14: #{content_model_forward.1} parent=0 // pred_check
    _
  $region15: #{content_model_forward.1} parent=0 // pred_check_branch
    %24 = sbr.rel (0) target = $region17
  $region16: #{content_model_forward.1} parent=0 // pred_region
    _
  $region17: #{content_model_forward.1} parent=0 // pred_fallthru
    _
  // Predicated region
  $region18: #{content_model_forward.1} parent=0 // pred_check
    _
  $region19: #{content_model_forward.1} parent=0 // pred_check_branch
    %26 = sbr.rel (0) target = $region21
  $region20: #{content_model_forward.1} parent=0 // pred_region
    _
  $region21: #{content_model_forward.1} parent=0 // pred_fallthru
    _
  // Predicated region
  $region22: #{content_model_forward.1} parent=0 // pred_check
    _
  $region23: #{content_model_forward.1} parent=0 // pred_check_branch
    %28 = sbr.rel (0) target = $region25
  $region24: #{content_model_forward.1} parent=0 // pred_region
    _
  $region25: #{content_model_forward.1} parent=0 // pred_fallthru
    _
  // Predicated region
  $region26: #{content_model_forward.1} parent=0 // pred_check
    _
  $region27: #{content_model_forward.1} parent=0 // pred_check_branch
    %30 = sbr.rel (0) target = $region29
  $region28: #{content_model_forward.1} parent=0 // pred_region
    _
  $region29: #{content_model_forward.1} parent=0 // pred_fallthru
    _
  // Predicated region
  $region30: #{content_model_forward.1} parent=0 // pred_check
    _
  $region31: #{content_model_forward.1} parent=0 // pred_check_branch
    %32 = sbr.rel (0) target = $region33
  $region32: #{content_model_forward.1} parent=0 // pred_region
    _
  $region33: #{content_model_forward.1} parent=0 // pred_fallthru
    _
  // Predicated region
  $region34: #{content_model_forward.1} parent=0 // pred_check
    _
  $region35: #{content_model_forward.1} parent=0 // pred_check_branch
    %34 = sbr.rel (0) target = $region37
  $region36: #{content_model_forward.1} parent=0 // pred_region
    _
  $region37: #{content_model_forward.1} parent=0 // pred_fallthru
    _
  // Predicated region
  $region38: #{content_model_forward.1} parent=0 // pred_check
    _
  $region39: #{content_model_forward.1} parent=0 // pred_check_branch
    %36 = sbr.rel (0) target = $region41
  $region40: #{content_model_forward.1} parent=0 // pred_region
    _
  $region41: #{content_model_forward.1} parent=0 // pred_fallthru
    _
  %v37 = vld [vmem:[%s0] sm:$0xff]
  %v38 = vld [vmem:[%s0 + $0x8] sm:$0xff]
  %v39 = vld [vmem:[%s0 + $0x10] sm:$0xff]
  %v40 = vld [vmem:[%s0 + $0x18] sm:$0xff]
  %v41 = vld [vmem:[%s0 + $0x20] sm:$0xff]
  %v42 = vld [vmem:[%s0 + $0x28] sm:$0xff]
  %v43 = vld [vmem:[%s0 + $0x30] sm:$0xff]
  %v44 = vld [vmem:[%s0 + $0x38] sm:$0xff]
  %v45 = vld [vmem:[%s0 + $0x40] sm:$0xff]
  %v46 = vld [vmem:[%s0 + $0x48] sm:$0xff]
  %v47 = vld [vmem:[%s0 + $0x50] sm:$0xff]
  %v48 = vld [vmem:[%s0 + $0x58] sm:$0xff]
  %v49 = vld [vmem:[%s1] sm:$0x3]
  %v50 = vld [vmem:[%s2] sm:$0xff]
  %52 = vset.pattern.permute.xlu0 0
  %53 = vperm.xlu0 %52, %v50
  %v54 = vpop.permute.xlu0 %53
  %v56 = vperm.slane %v49, 0
  %v57 = vmul.f32 %v54, %v56
  %58 = vset.pattern.permute.xlu0 1
  %59 = vperm.xlu0 %58, %v50
  %v60 = vpop.permute.xlu0 %59
  %v62 = vperm.slane %v49, 1
  %v63 = vmul.f32 %v60, %v62
  %v64 = vadd.f32 %v57, %v63
  %v65 = vld [vmem:[%s3] sm:$0xff]
  %67 = vset.pattern.permute.xlu0 0
  %68 = vperm.xlu0 %67, %v65
  %v69 = vpop.permute.xlu0 %68
  %v71 = vadd.f32 %v64, %v69
  %v72 = vmax.f32 %v71, 0.0
  %v73 = vld [vmem:[%s4] sm:$0xff]
  %v74 = vld [vmem:[%s5] sm:$0xff]
  %76 = vset.pattern.permute.xlu0 0
  %77 = vperm.xlu0 %76, %v73
  %v78 = vpop.permute.xlu0 %77
  %v80 = vperm.slane %v72, 0
  %v81 = vmul.f32 %v78, %v80
  %83 = vset.pattern.permute.xlu0 0
  %84 = vperm.xlu0 %83, %v74
  %v85 = vpop.permute.xlu0 %84
  %v87 = vadd.f32 %v85, %v81
  %88 = vset.pattern.permute.xlu0 1
  %89 = vperm.xlu0 %88, %v73
  %v90 = vpop.permute.xlu0 %89
  %v92 = vperm.slane %v72, 1
  %v93 = vmul.f32 %v90, %v92
  %v94 = vadd.f32 %v87, %v93
  %95 = vset.pattern.permute.xlu0 2
  %96 = vperm.xlu0 %95, %v73
  %v97 = vpop.permute.xlu0 %96
  %v99 = vperm.slane %v72, 2
  %v100 = vmul.f32 %v97, %v99
  %v101 = vadd.f32 %v94, %v100
  %102 = vset.pattern.permute.xlu0 3
  %103 = vperm.xlu0 %102, %v73
  %v104 = vpop.permute.xlu0 %103
  %v106 = vperm.slane %v72, 3
  %v107 = vmul.f32 %v104, %v106
  %v108 = vadd.f32 %v101, %v107
  %109 = vset.pattern.permute.xlu0 4
  %110 = vperm.xlu0 %109, %v73
  %v111 = vpop.permute.xlu0 %110
  %v113 = vperm.slane %v72, 4
  %v114 = vmul.f32 %v111, %v113
  %v115 = vadd.f32 %v108, %v114
  %116 = vset.pattern.permute.xlu0 5
  %117 = vperm.xlu0 %116, %v73
  %v118 = vpop.permute.xlu0 %117
  %v120 = vperm.slane %v72, 5
  %v121 = vmul.f32 %v118, %v120
  %v122 = vadd.f32 %v115, %v121
  %123 = vset.pattern.permute.xlu0 6
  %124 = vperm.xlu0 %123, %v73
  %v125 = vpop.permute.xlu0 %124
  %v127 = vperm.slane %v72, 6
  %v128 = vmul.f32 %v125, %v127
  %v129 = vadd.f32 %v122, %v128
  %130 = vset.pattern.permute.xlu0 7
  %131 = vperm.xlu0 %130, %v73
  %v132 = vpop.permute.xlu0 %131
  %v134 = vperm.slane %v72, 7
  %v135 = vmul.f32 %v132, %v134
  %v136 = vadd.f32 %v129, %v135
  %v137 = vld [vmem:[%s6] sm:$0xff]
  %v138 = vld [vmem:[%s6 + $0x8] sm:$0xff]
  %v139 = vld [vmem:[%s6 + $0x10] sm:$0xff]
  %v140 = vld [vmem:[%s6 + $0x18] sm:$0xff]
  %v141 = vld [vmem:[%s6 + $0x20] sm:$0xff]
  %v142 = vld [vmem:[%s6 + $0x28] sm:$0xff]
  %v143 = vld [vmem:[%s6 + $0x30] sm:$0xff]
  %v144 = vld [vmem:[%s6 + $0x38] sm:$0xff]
  %v145 = vld [vmem:[%s7] sm:$0xff]
  %v146 = vld [vmem:[%s7 + $0x8] sm:$0xff]
  %v147 = vld [vmem:[%s7 + $0x10] sm:$0xff]
  %v148 = vld [vmem:[%s7 + $0x18] sm:$0xff]
  %v149 = vld [vmem:[%s7 + $0x20] sm:$0xff]
  %v150 = vld [vmem:[%s7 + $0x28] sm:$0xff]
  %v151 = vld [vmem:[%s7 + $0x30] sm:$0xff]
  %v152 = vld [vmem:[%s7 + $0x38] sm:$0xff]
  %154 = vset.pattern.permute.xlu0 0
  %155 = vperm.xlu0 %154, %v145
  %v156 = vpop.permute.xlu0 %155
  %159 = vset.pattern.permute.xlu0 0
  %160 = vperm.xlu0 %159, %v146
  %v161 = vpop.permute.xlu0 %160
  %164 = vset.pattern.permute.xlu0 0
  %165 = vperm.xlu0 %164, %v147
  %v166 = vpop.permute.xlu0 %165
  %169 = vset.pattern.permute.xlu0 0
  %170 = vperm.xlu0 %169, %v148
  %v171 = vpop.permute.xlu0 %170
  %174 = vset.pattern.permute.xlu0 0
  %175 = vperm.xlu0 %174, %v149
  %v176 = vpop.permute.xlu0 %175
  %179 = vset.pattern.permute.xlu0 0
  %180 = vperm.xlu0 %179, %v150
  %v181 = vpop.permute.xlu0 %180
  %184 = vset.pattern.permute.xlu0 0
  %185 = vperm.xlu0 %184, %v151
  %v186 = vpop.permute.xlu0 %185
  %189 = vset.pattern.permute.xlu0 0
  %190 = vperm.xlu0 %189, %v152
  %v191 = vpop.permute.xlu0 %190
  %193 = vmatpush.msra.mxu0 0.0
  %194 = vmatpush.msra.mxu0 0.0
  %195 = vmatpush.msra.mxu0 0.0
  %196 = vmatpush.msra.mxu0 %v136
  %197 = vmatpush.msra.mxu0 %v48
  %198 = vmatpush.msra.mxu0 %v47
  %199 = vmatpush.msra.mxu0 %v46
  %200 = vmatpush.msra.mxu0 %v45
  %201 = vmatpush.msra.mxu0 %v44
  %202 = vmatpush.msra.mxu0 %v43
  %203 = vmatpush.msra.mxu0 %v42
  %204 = vmatpush.msra.mxu0 %v41
  %205 = vmatpush.msra.mxu0 %v40
  %206 = vmatpush.msra.mxu0 %v39
  %207 = vmatpush.msra.mxu0 %v38
  %208 = vmatpush.msra.mxu0 %v37
  %209 = vmatmul.f32.gmra.mxu0 %v137
  %v210 = vpop.f32.mrf.mxu0
  %v211 = vadd.f32 %v156, %v210
  %212 = vmatmul.f32.gmra.mxu0 %v138
  %v213 = vpop.f32.mrf.mxu0
  %v214 = vadd.f32 %v161, %v213
  %215 = vmatmul.f32.gmra.mxu0 %v139
  %v216 = vpop.f32.mrf.mxu0
  %v217 = vadd.f32 %v166, %v216
  %218 = vmatmul.f32.gmra.mxu0 %v140
  %v219 = vpop.f32.mrf.mxu0
  %v220 = vadd.f32 %v171, %v219
  %221 = vmatmul.f32.gmra.mxu0 %v141
  %v222 = vpop.f32.mrf.mxu0
  %v223 = vadd.f32 %v176, %v222
  %224 = vmatmul.f32.gmra.mxu0 %v142
  %v225 = vpop.f32.mrf.mxu0
  %v226 = vadd.f32 %v181, %v225
  %227 = vmatmul.f32.gmra.mxu0 %v143
  %v228 = vpop.f32.mrf.mxu0
  %v229 = vadd.f32 %v186, %v228
  %230 = vmatmul.f32.gmra.mxu0 %v144
  %v231 = vpop.f32.mrf.mxu0
  %v232 = vadd.f32 %v191, %v231
  %233 = vdwg.mxu0
  %v234 = vmax.f32 %v211, 0.0
  %v235 = vmax.f32 %v214, 0.0
  %v236 = vmax.f32 %v217, 0.0
  %v237 = vmax.f32 %v220, 0.0
  %v238 = vmax.f32 %v223, 0.0
  %v239 = vmax.f32 %v226, 0.0
  %v240 = vmax.f32 %v229, 0.0
  %v241 = vmax.f32 %v232, 0.0
  %v242 = vld [vmem:[%s8] sm:$0x1]
  %v243 = vld [vmem:[#allocation2] sm:$0x1]
  %245 = vset.pattern.permute.xlu0 0
  %246 = vperm.xlu0 %245, %v243
  %v247 = vpop.permute.xlu0 %246
  %v249 = vperm.slane %v247, 0
  %vm250 = vcmask 523264
  %v252 = vsel %vm250, %v242, 0
  %254 = vmatpush.msra.mxu0 0.0
  %255 = vmatpush.msra.mxu0 0.0
  %256 = vmatpush.msra.mxu0 0.0
  %257 = vmatpush.msra.mxu0 0.0
  %258 = vmatpush.msra.mxu0 0.0
  %259 = vmatpush.msra.mxu0 0.0
  %260 = vmatpush.msra.mxu0 0.0
  %261 = vmatpush.msra.mxu0 0.0
  %262 = vmatpush.msra.mxu0 %v241
  %263 = vmatpush.msra.mxu0 %v240
  %264 = vmatpush.msra.mxu0 %v239
  %265 = vmatpush.msra.mxu0 %v238
  %266 = vmatpush.msra.mxu0 %v237
  %267 = vmatpush.msra.mxu0 %v236
  %268 = vmatpush.msra.mxu0 %v235
  %269 = vmatpush.msra.mxu0 %v234
  %270 = vmatmul.f32.gmra.mxu0 %v252
  %v271 = vpop.f32.mrf.mxu0
  %v272 = vadd.f32 %v249, %v271
  %273 = vdwg.mxu0
  %274 = vst [vmem:[%s10] sm:$0x1] %v272
  // Predicated region
  $region42: #{content_model_forward.1} parent=0 // pred_check
    _
  $region43: #{content_model_forward.1} parent=0 // pred_check_branch
    %276 = sbr.rel (0) target = $region45
  $region44: #{content_model_forward.1} parent=0 // pred_region
    _
  $region45: #{content_model_forward.1} parent=0 // pred_fallthru
    _
  // Predicated region
  $region46: #{content_model_forward.1} parent=0 // pred_check
    _
  $region47: #{content_model_forward.1} parent=0 // pred_check_branch
    %278 = sbr.rel (0) target = $region49
  $region48: #{content_model_forward.1} parent=0 // pred_region
    _
  $region49: #{content_model_forward.1} parent=0 // pred_fallthru
    _

</llo_original>
